<compile_context>
chip_gen: v7x
topology: tpu7x:2x2x1
jax: 0.10.0
libtpu: 0.0.40
codegen_flags: <defaults>
</compile_context>

<pallas_src>
import math
import functools

import jax
import jax.numpy as jnp
import numpy as np
from jax import lax
from jax.experimental import pallas as pl
from jax.experimental.pallas import tpu as pltpu


def _round_up(x, n):
    return ((x + n - 1) // n) * n


def _default_vmem_limit(B, D, block_c, mxu_itemsize):
    """VMEM budget for one core's pipeline: W double-buffer + intermediates + headroom."""
    w_stream = 2 * D * block_c * mxu_itemsize        # double-buffered weight tiles
    x_in     = 2 * B * D * 4                         # x input window (f32)
    lbl_in   = 2 * max(B, 8) * 128 * 4               # labels, padded to a lane tile
    xn_scr   = B * max(D, 128) * mxu_itemsize        # cached normalized x
    accs     = 3 * max(B, 8) * 128 * 4               # m / l / t accumulators (padded)
    out_buf  = 2 * max(B, 8) * 128 * 4               # packed partial-output tile
    interm   = 2 * B * block_c * 4                   # f32 cosine / masked-logit tiles
    total = w_stream + x_in + lbl_in + xn_scr + accs + out_buf + interm
    return int(total * 1.25) + (2 << 20)             # ~25% headroom + compiler scratch


def _aam_partial_kernel(x_ref, wt_ref, label_ref, out_ref,
                        m_acc, l_acc, t_acc, xn_ref,
                        *, s, n_class, block_c, tiles_per_split, has_pad):
    """Per-split online logsumexp over a stream of pre-normalized weight-class tiles.

    Emits, per parallel split p, a lane-packed (1, B, 128) tile:
      lane 0: running max of NON-target logits (s * cosine)
      lane 1: running sum-exp of NON-target logits (w.r.t. lane-0 max)
      lane 2: target-column cosine (0 if the target is not in this split)
    Margin math / CE / accuracy are finished in the wrapper on (B,)-sized data.
    """
    p = pl.program_id(0)
    c = pl.program_id(1)
    n_inner = pl.num_programs(1)

    @pl.when(c == 0)
    def _init():
        m_acc[...] = jnp.full_like(m_acc, -jnp.inf)
        l_acc[...] = jnp.zeros_like(l_acc)
        t_acc[...] = jnp.zeros_like(t_acc)
        # F.normalize(x): x / max(||x||, eps); computed once, cached in MXU dtype.
        eps = 1e-12
        x = x_ref[...]
        xsq = jnp.sum(x * x, axis=-1, keepdims=True)
        xn_ref[...] = (x * lax.rsqrt(jnp.maximum(xsq, eps * eps))).astype(xn_ref.dtype)

    # W columns were pre-normalized in the wrapper -> this dot IS the cosine.
    cosine = jnp.dot(xn_ref[...], wt_ref[...],
                     preferred_element_type=jnp.float32)          # (B, Ct) f32

    B, Ct = cosine.shape
    label = label_ref[...]                                        # (B, 1) int32
    tile_idx = p * tiles_per_split + c
    class_ids = tile_idx * block_c + lax.broadcasted_iota(jnp.int32, (B, Ct), 1)
    is_target = class_ids == label                                # (B, Ct) bool

    # Each row's target class lives in exactly one tile of exactly one split.
    t_acc[...] += jnp.sum(jnp.where(is_target, cosine, 0.0), axis=-1, keepdims=True)

    # Online logsumexp over NON-target logits only; the target's phi is folded in later.
    keep = jnp.logical_not(is_target)
    if has_pad:  # mask padded classes of the last partial tile
        keep = jnp.logical_and(keep, class_ids < n_class)
    logits_nt = jnp.where(keep, s * cosine, -jnp.inf)

    m_prev = m_acc[...]
    m_new = jnp.maximum(m_prev, jnp.max(logits_nt, axis=-1, keepdims=True))
    # NaN guard: a fully-masked tile (all-padding split) keeps m == -inf, l == 0.
    finite = m_new > -jnp.inf
    alpha = jnp.where(finite, jnp.exp(m_prev - m_new), 0.0)
    p_sum = jnp.sum(jnp.where(keep, jnp.exp(logits_nt - m_new), 0.0),
                    axis=-1, keepdims=True)
    l_acc[...] = l_acc[...] * alpha + p_sum
    m_acc[...] = m_new

    @pl.when(c == n_inner - 1)
    def _writeout():
        lane = lax.broadcasted_iota(jnp.int32, out_ref.shape, 2)   # (1, B, 128)
        m_b = m_acc[...].reshape(1, B, 1)
        l_b = l_acc[...].reshape(1, B, 1)
        t_b = t_acc[...].reshape(1, B, 1)
        out_ref[...] = jnp.where(lane == 0, m_b,
                         jnp.where(lane == 1, l_b,
                          jnp.where(lane == 2, t_b, 0.0)))


def aamsoftmax_forward(x, weight, label, *, m, s,
                       block_c=8192, num_splits=2,
                       mxu_dtype=jnp.bfloat16, vmem_limit_bytes=None):
    """Returns (loss, prec1), matching AAMsoftmax.forward semantics."""
    cos_m = math.cos(m)
    sin_m = math.sin(m)
    th = math.cos(math.pi - m)
    mm = math.sin(math.pi - m) * m
    eps = 1e-12

    x = jnp.asarray(x).astype(jnp.float32)
    weight = jnp.asarray(weight)
    B, D = x.shape
    C, D2 = weight.shape
    assert D == D2, "feature dims of x and weight must match"

    # Pre-normalize W rows (classes) once, fused into the transpose/cast the wrapper
    # already does.  The kernel then never touches column norms.
    w32 = weight.astype(jnp.float32)
    w_inv = lax.rsqrt(jnp.maximum(jnp.sum(w32 * w32, axis=1, keepdims=True), eps * eps))
    w_t = (w32 * w_inv).T.astype(mxu_dtype)                       # (D, C), lane-dense classes

    num_splits = max(1, int(num_splits))
    block_c = max(128, (int(block_c) // 128) * 128)
    block_c = min(block_c, _round_up(pl.cdiv(C, num_splits), 128))
    c_pad = _round_up(C, num_splits * block_c)
    if c_pad != C:
        w_t = jnp.pad(w_t, ((0, 0), (0, c_pad - C)))
    n_tiles = c_pad // block_c
    tiles_per_split = n_tiles // num_splits

    label2d = jnp.asarray(label).astype(jnp.int32).reshape(B, 1)

    if vmem_limit_bytes is None:
        vmem_limit_bytes = _default_vmem_limit(B, D, block_c,
                                               jnp.dtype(mxu_dtype).itemsize)

    kernel = functools.partial(
        _aam_partial_kernel, s=float(s), n_class=C, block_c=block_c,
        tiles_per_split=tiles_per_split, has_pad=(c_pad != C))

    grid_spec = pltpu.PrefetchScalarGridSpec(
        num_scalar_prefetch=0,
        grid=(num_splits, tiles_per_split),
        in_specs=[
            pl.BlockSpec((B, D), lambda p, c: (0, 0)),                    # x (resident)
            pl.BlockSpec((D, block_c),
                         lambda p, c: (0, p * tiles_per_split + c)),      # streamed W tiles
            pl.BlockSpec((B, 1), lambda p, c: (0, 0)),                    # labels (resident)
        ],
        out_specs=pl.BlockSpec((1, B, 128), lambda p, c: (p, 0, 0)),      # per-split partials
        scratch_shapes=[
            pltpu.VMEM((B, 1), jnp.float32),   # running non-target max (of s*cosine)
            pltpu.VMEM((B, 1), jnp.float32),   # running non-target sum-exp
            pltpu.VMEM((B, 1), jnp.float32),   # target cosine
            pltpu.VMEM((B, D), mxu_dtype),     # cached normalized x
        ],
    )

    parts = pl.pallas_call(
        kernel,
        out_shape=jax.ShapeDtypeStruct((num_splits, B, 128), jnp.float32),
        grid_spec=grid_spec,
        compiler_params=pltpu.CompilerParams(
            dimension_semantics=("parallel", "arbitrary"),
            vmem_limit_bytes=int(vmem_limit_bytes),
        ),
    )(x, w_t, label2d)

    # ---- tiny (B,)-sized epilogue in XLA: merge split partials, margin, CE, top-1 ----
    m_nt = parts[:, :, 0]                            # (S, B)
    l_nt = parts[:, :, 1]                            # (S, B)
    t_cos = jnp.sum(parts[:, :, 2], axis=0)          # (B,)
    m_glob = jnp.max(m_nt, axis=0)                   # (B,)   (finite whenever C >= 2)
    l_glob = jnp.sum(l_nt * jnp.exp(m_nt - m_glob[None, :]), axis=0)

    # Angular-margin math on the target cosines only (easy_margin=False path).
    sine = jnp.sqrt(jnp.clip(1.0 - t_cos * t_cos, 0.0, 1.0))
    phi = t_cos * cos_m - sine * sin_m
    phi = jnp.where(t_cos - th > 0.0, phi, t_cos - mm)
    t_logit = s * phi                                # (B,)

    m_fin = jnp.maximum(m_glob, t_logit)
    l_fin = l_glob * jnp.exp(m_glob - m_fin) + jnp.exp(t_logit - m_fin)
    lse = m_fin + jnp.log(l_fin)

    loss = jnp.mean(lse - t_logit)                   # CrossEntropyLoss, mean reduction
    # top-1 accuracy: correct iff target logit beats every non-target logit
    # (tie-break on exact float ties differs from torch.argmax; don't-care).
    prec1 = jnp.mean((t_logit >= m_glob).astype(jnp.float32)) * 100.0
    return loss, prec1


def _reference(x, weight, label, *, m, s):
    """Pure-JAX reference mirroring the PyTorch module (f32 throughout)."""
    eps = 1e-12
    xn = x / jnp.maximum(jnp.linalg.norm(x, axis=1, keepdims=True), eps)
    wn = weight / jnp.maximum(jnp.linalg.norm(weight, axis=1, keepdims=True), eps)
    cosine = jnp.dot(xn, wn.T, precision=lax.Precision.HIGHEST)
    sine = jnp.sqrt(jnp.clip(1.0 - cosine * cosine, 0.0, 1.0))
    phi = cosine * math.cos(m) - sine * math.sin(m)
    th = math.cos(math.pi - m)
    mm = math.sin(math.pi - m) * m
    phi = jnp.where(cosine - th > 0.0, phi, cosine - mm)
    one_hot = jax.nn.one_hot(label, weight.shape[0], dtype=jnp.float32)
    output = (one_hot * phi + (1.0 - one_hot) * cosine) * s
    lse = jax.scipy.special.logsumexp(output, axis=1)
    tgt = jnp.take_along_axis(output, label[:, None], axis=1)[:, 0]
    loss = jnp.mean(lse - tgt)
    prec1 = jnp.mean((jnp.argmax(output, axis=1) == label).astype(jnp.float32)) * 100.0
    return loss, prec1


if __name__ == "__main__":
    key = jax.random.PRNGKey(0)
    kx, kw, kl = jax.random.split(key, 3)

    n_class = 500
    feat_dim = 512          # hardcoded in the PyTorch module
    batch = 8
    m = 0.2
    s = 30.0

    # Xavier-normal init for weight (gain=1): std = sqrt(2 / (fan_in + fan_out))
    std = math.sqrt(2.0 / (n_class + feat_dim))
    weight = std * jax.random.normal(kw, (n_class, feat_dim), dtype=jnp.float32)
    x = jax.random.normal(kx, (batch, feat_dim), dtype=jnp.float32)
    label = jax.random.randint(kl, (batch,), 0, n_class, dtype=jnp.int32)

    # block_c=128 exercises the 2-way split, multi-tile online LSE, and last-tile padding.
    loss, prec1 = aamsoftmax_forward(x, weight, label, m=m, s=s, block_c=128)
    jax.block_until_ready((loss, prec1))

    # Self-check against the pure-JAX reference using the f32 MXU path (loose tolerance
    # absorbs MXU-vs-XLA matmul rounding); the bf16 run above is the perf path.
    loss32, prec32 = aamsoftmax_forward(x, weight, label, m=m, s=s, block_c=128,
                                        mxu_dtype=jnp.float32)
    ref_loss, ref_prec = _reference(x, weight, label, m=m, s=s)
    np.testing.assert_allclose(float(loss32), float(ref_loss), rtol=5e-2, atol=5e-2)
    np.testing.assert_allclose(float(prec32), float(ref_prec), atol=1e-3)

    print("KERNEL_OK")
</pallas_src>

<mosaic_0001>
module attributes {stable_mosaic.version = 11 : i64} {
  func.func @_aam_partial_kernel(%arg0: i32, %arg1: i32, %arg2: memref<8x512xf32, #tpu.memory_space<vmem>>, %arg3: memref<512x128xbf16, #tpu.memory_space<vmem>>, %arg4: memref<8x1xi32, #tpu.memory_space<vmem>>, %arg5: memref<1x8x128xf32, #tpu.memory_space<vmem>>, %arg6: memref<8x1xf32, #tpu.memory_space<vmem>>, %arg7: memref<8x1xf32, #tpu.memory_space<vmem>>, %arg8: memref<8x1xf32, #tpu.memory_space<vmem>>, %arg9: memref<8x512xbf16, #tpu.memory_space<vmem>>) attributes {dimension_semantics = [#tpu.dimension_semantics<parallel>, #tpu.dimension_semantics<arbitrary>], iteration_bounds = array<i64: 2, 2>, scalar_prefetch = 0 : i64, scratch_operands = 4 : i64, tpu.core_type = #tpu.core_type<tc>, window_params = [{pipeline_mode = #tpu.pipeline_mode<synchronous>, transform_indices = @transform_0, window_bounds = array<i64: 8, 512>}, {transform_indices = @transform_1, window_bounds = array<i64: 512, 128>}, {pipeline_mode = #tpu.pipeline_mode<synchronous>, transform_indices = @transform_2, window_bounds = array<i64: 8, 1>}, {transform_indices = @transform_3, window_bounds = array<i64: 1, 8, 128>}]} {
    %c0_i32 = arith.constant 0 : i32
    %0 = arith.cmpi eq, %arg1, %c0_i32 : i32
    %1 = arith.extui %0 : i1 to i32
    %c0_i32_0 = arith.constant 0 : i32
    %2 = arith.cmpi ne, %1, %c0_i32_0 : i32
    scf.if %2 {
      %cst_29 = arith.constant 0xFF800000 : f32
      %55 = vector.broadcast %cst_29 : f32 to vector<8x1xf32>
      %c0_30 = arith.constant 0 : index
      %c0_31 = arith.constant 0 : index
      %56 = vector.load %arg6[%c0_30, %c0_31] : memref<8x1xf32, #tpu.memory_space<vmem>>, vector<8x1xf32>
      tpu.vector_store %arg6[%c0_30, %c0_31], %55 {strides = array<i32>} : memref<8x1xf32, #tpu.memory_space<vmem>>, vector<8x1xf32>,
      %cst_32 = arith.constant 0.000000e+00 : f32
      %57 = vector.broadcast %cst_32 : f32 to vector<8x1xf32>
      %c0_33 = arith.constant 0 : index
      %c0_34 = arith.constant 0 : index
      %58 = vector.load %arg7[%c0_33, %c0_34] : memref<8x1xf32, #tpu.memory_space<vmem>>, vector<8x1xf32>
      tpu.vector_store %arg7[%c0_33, %c0_34], %57 {strides = array<i32>} : memref<8x1xf32, #tpu.memory_space<vmem>>, vector<8x1xf32>,
      %cst_35 = arith.constant 0.000000e+00 : f32
      %59 = vector.broadcast %cst_35 : f32 to vector<8x1xf32>
      %c0_36 = arith.constant 0 : index
      %c0_37 = arith.constant 0 : index
      %60 = vector.load %arg8[%c0_36, %c0_37] : memref<8x1xf32, #tpu.memory_space<vmem>>, vector<8x1xf32>
      tpu.vector_store %arg8[%c0_36, %c0_37], %59 {strides = array<i32>} : memref<8x1xf32, #tpu.memory_space<vmem>>, vector<8x1xf32>,
      %c0_38 = arith.constant 0 : index
      %c0_39 = arith.constant 0 : index
      %61 = vector.load %arg2[%c0_38, %c0_39] : memref<8x512xf32, #tpu.memory_space<vmem>>, vector<8x512xf32>
      %62 = arith.mulf %61, %61 : vector<8x512xf32>
      %cst_40 = arith.constant dense<0.000000e+00> : vector<8xf32>
      %63 = vector.multi_reduction <add>, %62, %cst_40 [1] : vector<8x512xf32> to vector<8xf32>
      %64 = vector.shape_cast %63 : vector<8xf32> to vector<8x1xf32>
      %cst_41 = arith.constant 1.000000e-24 : f32
      %65 = vector.broadcast %cst_41 : f32 to vector<8x1xf32>
      %66 = arith.maximumf %64, %65 : vector<8x1xf32>
      %67 = math.rsqrt %66 : vector<8x1xf32>
      %68 = vector.broadcast %67 : vector<8x1xf32> to vector<8x512xf32>
      %69 = arith.mulf %61, %68 : vector<8x512xf32>
      %70 = arith.truncf %69 : vector<8x512xf32> to vector<8x512xbf16>
      %c0_42 = arith.constant 0 : index
      %c0_43 = arith.constant 0 : index
      %71 = vector.load %arg9[%c0_42, %c0_43] : memref<8x512xbf16, #tpu.memory_space<vmem>>, vector<8x512xbf16>
      tpu.vector_store %arg9[%c0_42, %c0_43], %70 {strides = array<i32>} : memref<8x512xbf16, #tpu.memory_space<vmem>>, vector<8x512xbf16>,
    } else {
    }
    %c0 = arith.constant 0 : index
    %c0_1 = arith.constant 0 : index
    %3 = vector.load %arg9[%c0, %c0_1] : memref<8x512xbf16, #tpu.memory_space<vmem>>, vector<8x512xbf16>
    %c0_2 = arith.constant 0 : index
    %c0_3 = arith.constant 0 : index
    %4 = vector.load %arg3[%c0_2, %c0_3] : memref<512x128xbf16, #tpu.memory_space<vmem>>, vector<512x128xbf16>
    %cst = arith.constant dense<0.000000e+00> : vector<8x128xf32>
    %5 = tpu.matmul %3, %4, %cst {dimension_numbers = #tpu.dot_dimension_numbers<[1], [0], [0], [1], [0, 0, 1, 1], [], []>} : vector<8x512xbf16>, vector<512x128xbf16>, vector<8x128xf32> -> vector<8x128xf32>
    %c0_4 = arith.constant 0 : index
    %c0_5 = arith.constant 0 : index
    %6 = vector.load %arg4[%c0_4, %c0_5] : memref<8x1xi32, #tpu.memory_space<vmem>>, vector<8x1xi32>
    %c2_i32 = arith.constant 2 : i32
    %7 = arith.muli %arg0, %c2_i32 : i32
    %8 = arith.addi %7, %arg1 : i32
    %c128_i32 = arith.constant 128 : i32
    %9 = arith.muli %8, %c128_i32 : i32
    %10 = tpu.iota {dimensions = array<i32: 1>} : vector<8x128xi32>
    %11 = vector.broadcast %9 : i32 to vector<8x128xi32>
    %12 = arith.addi %11, %10 : vector<8x128xi32>
    %13 = vector.broadcast %6 : vector<8x1xi32> to vector<8x128xi32>
    %14 = arith.cmpi eq, %12, %13 : vector<8x128xi32>
    %c0_6 = arith.constant 0 : index
    %c0_7 = arith.constant 0 : index
    %15 = vector.load %arg8[%c0_6, %c0_7] : memref<8x1xf32, #tpu.memory_space<vmem>>, vector<8x1xf32>
    %cst_8 = arith.constant 0.000000e+00 : f32
    %16 = vector.broadcast %cst_8 : f32 to vector<8x128xf32>
    %17 = arith.select %14, %5, %16 : vector<8x128xi1>, vector<8x128xf32>
    %cst_9 = arith.constant dense<0.000000e+00> : vector<8xf32>
    %18 = vector.multi_reduction <add>, %17, %cst_9 [1] : vector<8x128xf32> to vector<8xf32>
    %19 = vector.shape_cast %18 : vector<8xf32> to vector<8x1xf32>
    %20 = arith.addf %15, %19 : vector<8x1xf32>
    %c0_10 = arith.constant 0 : index
    %c0_11 = arith.constant 0 : index
    %21 = vector.load %arg8[%c0_10, %c0_11] : memref<8x1xf32, #tpu.memory_space<vmem>>, vector<8x1xf32>
    tpu.vector_store %arg8[%c0_10, %c0_11], %20 {strides = array<i32>} : memref<8x1xf32, #tpu.memory_space<vmem>>, vector<8x1xf32>,
    %cst_12 = arith.constant dense<true> : vector<8x128xi1>
    %22 = arith.xori %14, %cst_12 : vector<8x128xi1>
    %c500_i32 = arith.constant 500 : i32
    %23 = vector.broadcast %c500_i32 : i32 to vector<8x128xi32>
    %24 = arith.cmpi slt, %12, %23 : vector<8x128xi32>
    %25 = arith.andi %22, %24 : vector<8x128xi1>
    %cst_13 = arith.constant 3.000000e+01 : f32
    %26 = vector.broadcast %cst_13 : f32 to vector<8x128xf32>
    %27 = arith.mulf %26, %5 : vector<8x128xf32>
    %cst_14 = arith.constant 0xFF800000 : f32
    %28 = vector.broadcast %cst_14 : f32 to vector<8x128xf32>
    %29 = arith.select %25, %27, %28 : vector<8x128xi1>, vector<8x128xf32>
    %c0_15 = arith.constant 0 : index
    %c0_16 = arith.constant 0 : index
    %30 = vector.load %arg6[%c0_15, %c0_16] : memref<8x1xf32, #tpu.memory_space<vmem>>, vector<8x1xf32>
    %cst_17 = arith.constant dense<0xFF800000> : vector<8xf32>
    %31 = vector.multi_reduction <maximumf>, %29, %cst_17 [1] : vector<8x128xf32> to vector<8xf32>
    %32 = vector.shape_cast %31 : vector<8xf32> to vector<8x1xf32>
    %33 = arith.maximumf %30, %32 : vector<8x1xf32>
    %cst_18 = arith.constant 0xFF800000 : f32
    %34 = vector.broadcast %cst_18 : f32 to vector<8x1xf32>
    %35 = arith.cmpf ogt, %33, %34 : vector<8x1xf32>
    %36 = arith.subf %30, %33 : vector<8x1xf32>
    %37 = math.exp %36 : vector<8x1xf32>
    %cst_19 = arith.constant 0.000000e+00 : f32
    %38 = vector.broadcast %cst_19 : f32 to vector<8x1xf32>
    %39 = arith.select %35, %37, %38 : vector<8x1xi1>, vector<8x1xf32>
    %40 = vector.broadcast %33 : vector<8x1xf32> to vector<8x128xf32>
    %41 = arith.subf %29, %40 : vector<8x128xf32>
    %42 = math.exp %41 : vector<8x128xf32>
    %cst_20 = arith.constant 0.000000e+00 : f32
    %43 = vector.broadcast %cst_20 : f32 to vector<8x128xf32>
    %44 = arith.select %25, %42, %43 : vector<8x128xi1>, vector<8x128xf32>
    %cst_21 = arith.constant dense<0.000000e+00> : vector<8xf32>
    %45 = vector.multi_reduction <add>, %44, %cst_21 [1] : vector<8x128xf32> to vector<8xf32>
    %46 = vector.shape_cast %45 : vector<8xf32> to vector<8x1xf32>
    %c0_22 = arith.constant 0 : index
    %c0_23 = arith.constant 0 : index
    %47 = vector.load %arg7[%c0_22, %c0_23] : memref<8x1xf32, #tpu.memory_space<vmem>>, vector<8x1xf32>
    %48 = arith.mulf %47, %39 : vector<8x1xf32>
    %49 = arith.addf %48, %46 : vector<8x1xf32>
    %c0_24 = arith.constant 0 : index
    %c0_25 = arith.constant 0 : index
    %50 = vector.load %arg7[%c0_24, %c0_25] : memref<8x1xf32, #tpu.memory_space<vmem>>, vector<8x1xf32>
    tpu.vector_store %arg7[%c0_24, %c0_25], %49 {strides = array<i32>} : memref<8x1xf32, #tpu.memory_space<vmem>>, vector<8x1xf32>,
    %c0_26 = arith.constant 0 : index
    %c0_27 = arith.constant 0 : index
    %51 = vector.load %arg6[%c0_26, %c0_27] : memref<8x1xf32, #tpu.memory_space<vmem>>, vector<8x1xf32>
    tpu.vector_store %arg6[%c0_26, %c0_27], %33 {strides = array<i32>} : memref<8x1xf32, #tpu.memory_space<vmem>>, vector<8x1xf32>,
    %c1_i32 = arith.constant 1 : i32
    %52 = arith.cmpi eq, %arg1, %c1_i32 : i32
    %53 = arith.extui %52 : i1 to i32
    %c0_i32_28 = arith.constant 0 : i32
    %54 = arith.cmpi ne, %53, %c0_i32_28 : i32
    scf.if %54 {
      %55 = tpu.iota {dimensions = array<i32: 2>} : vector<1x8x128xi32>
      %c0_29 = arith.constant 0 : index
      %c0_30 = arith.constant 0 : index
      %56 = vector.load %arg6[%c0_29, %c0_30] : memref<8x1xf32, #tpu.memory_space<vmem>>, vector<8x1xf32>
      %57 = vector.shape_cast %56 : vector<8x1xf32> to vector<1x8x1xf32>
      %c0_31 = arith.constant 0 : index
      %c0_32 = arith.constant 0 : index
      %58 = vector.load %arg7[%c0_31, %c0_32] : memref<8x1xf32, #tpu.memory_space<vmem>>, vector<8x1xf32>
      %59 = vector.shape_cast %58 : vector<8x1xf32> to vector<1x8x1xf32>
      %c0_33 = arith.constant 0 : index
      %c0_34 = arith.constant 0 : index
      %60 = vector.load %arg8[%c0_33, %c0_34] : memref<8x1xf32, #tpu.memory_space<vmem>>, vector<8x1xf32>
      %61 = vector.shape_cast %60 : vector<8x1xf32> to vector<1x8x1xf32>
      %c0_i32_35 = arith.constant 0 : i32
      %62 = vector.broadcast %c0_i32_35 : i32 to vector<1x8x128xi32>
      %63 = arith.cmpi eq, %55, %62 : vector<1x8x128xi32>
      %c1_i32_36 = arith.constant 1 : i32
      %64 = vector.broadcast %c1_i32_36 : i32 to vector<1x8x128xi32>
      %65 = arith.cmpi eq, %55, %64 : vector<1x8x128xi32>
      %c2_i32_37 = arith.constant 2 : i32
      %66 = vector.broadcast %c2_i32_37 : i32 to vector<1x8x128xi32>
      %67 = arith.cmpi eq, %55, %66 : vector<1x8x128xi32>
      %cst_38 = arith.constant 0.000000e+00 : f32
      %68 = vector.shape_cast %61 : vector<1x8x1xf32> to vector<1x8x1xf32>
      %69 = vector.broadcast %68 : vector<1x8x1xf32> to vector<1x8x128xf32>
      %70 = vector.broadcast %cst_38 : f32 to vector<1x8x128xf32>
      %71 = arith.select %67, %69, %70 : vector<1x8x128xi1>, vector<1x8x128xf32>
      %72 = vector.shape_cast %59 : vector<1x8x1xf32> to vector<1x8x1xf32>
      %73 = vector.broadcast %72 : vector<1x8x1xf32> to vector<1x8x128xf32>
      %74 = arith.select %65, %73, %71 : vector<1x8x128xi1>, vector<1x8x128xf32>
      %75 = vector.shape_cast %57 : vector<1x8x1xf32> to vector<1x8x1xf32>
      %76 = vector.broadcast %75 : vector<1x8x1xf32> to vector<1x8x128xf32>
      %77 = arith.select %63, %76, %74 : vector<1x8x128xi1>, vector<1x8x128xf32>
      %c0_39 = arith.constant 0 : index
      %c0_40 = arith.constant 0 : index
      %c0_41 = arith.constant 0 : index
      %78 = vector.load %arg5[%c0_39, %c0_40, %c0_41] : memref<1x8x128xf32, #tpu.memory_space<vmem>>, vector<1x8x128xf32>
      tpu.vector_store %arg5[%c0_39, %c0_40, %c0_41], %77 {strides = array<i32>} : memref<1x8x128xf32, #tpu.memory_space<vmem>>, vector<1x8x128xf32>,
    } else {
    }
    return
  }
  func.func @transform_0(%arg0: i32, %arg1: i32) -> (i32, i32) {
    %c0_i32 = arith.constant 0 : i32
    %c0_i32_0 = arith.constant 0 : i32
    %c0_i32_1 = arith.constant 0 : i32
    return %c0_i32, %c0_i32_0 : i32, i32
  }
  func.func @transform_1(%arg0: i32, %arg1: i32) -> (i32, i32) {
    %c2_i32 = arith.constant 2 : i32
    %0 = arith.muli %arg0, %c2_i32 : i32
    %1 = arith.addi %0, %arg1 : i32
    %c0_i32 = arith.constant 0 : i32
    %c0_i32_0 = arith.constant 0 : i32
    return %c0_i32, %1 : i32, i32
  }
  func.func @transform_2(%arg0: i32, %arg1: i32) -> (i32, i32) {
    %c0_i32 = arith.constant 0 : i32
    %c0_i32_0 = arith.constant 0 : i32
    %c0_i32_1 = arith.constant 0 : i32
    return %c0_i32, %c0_i32_0 : i32, i32
  }
  func.func @transform_3(%arg0: i32, %arg1: i32) -> (i32, i32, i32) {
    %c0_i32 = arith.constant 0 : i32
    %c0_i32_0 = arith.constant 0 : i32
    %c0_i32_1 = arith.constant 0 : i32
    return %arg0, %c0_i32, %c0_i32_0 : i32, i32, i32
  }
}

</mosaic_0001>

<llo_original>
// kernel: tpu_custom_call.1
$region0: #{tpu_custom_call.1}
  #allocation0 [shape = 'u32[]', space=smem, size = 0x4, offset = 0x4, fixed_abs, tag = 'smem constant byte address 0x4 - core index']
  #allocation1 [shape = 'u32[144,128]{1,0:T(1,128)}', space=vmem, size = 0x12000, scoped, tag = 'internal scratch']
  #allocation2 [shape = 'f32[8,1]{1,0:T(8,128)}', space=vmem, size = 0x1000, scoped, tag = 'scratch operand']
  #allocation3 [shape = 'f32[8,1]{1,0:T(8,128)}', space=vmem, size = 0x1000, scoped, tag = 'scratch operand']
  #allocation4 [shape = 'f32[8,1]{1,0:T(8,128)}', space=vmem, size = 0x1000, scoped, tag = 'scratch operand']
  #allocation5 [shape = 'bf16[8,512]{1,0:T(8,128)(2,1)}', space=vmem, size = 0x2000, scoped, tag = 'scratch operand']
  %s0 = inlined_call_operand.hbm [shape: f32[8,512], index: 0, kind: input, shape index: {}]
  %s1 = inlined_call_operand.hbm [shape: bf16[512,512], index: 1, kind: input, shape index: {}]
  %s2 = inlined_call_operand.vmem [shape: s32[8,1], index: 2, kind: input, shape index: {}]
  %s3 = inlined_call_operand.hbm [shape: f32[2,8,128], index: 3, kind: output, shape index: {}]
  %s4 = sld [smem:[#allocation0]]
  $region61: #{tpu_custom_call.1} parent=0
    _
  %s6 = ssub.s32 1, %s4
  %s7 = scalar_select 0, %s6, %s4
  $region1: #{tpu_custom_call.1} parent=0
    #allocation6 [shape = 'u8[16384]{0}', space=vmem, size = 0x4000, scoped, tag = 'input window, operand 0, single buffered']
    #allocation7 [shape = 's32[2]{0}', space=sflag, size = 0x8, scoped, tag = 'scoped memory for tpu_custom_call.1']
    #allocation8 [shape = 's32[2]{0}', space=sflag, size = 0x8, scoped, tag = 'scoped memory for tpu_custom_call.1']
    #allocation9 [shape = 'u8[262144]{0}', space=vmem, size = 0x40000, scoped, tag = 'input window, operand 1']
    #allocation10 [shape = 's32[2]{0}', space=sflag, size = 0x8, scoped, tag = 'scoped memory for tpu_custom_call.1']
    #allocation11 [shape = 'u8[8192]{0}', space=vmem, size = 0x2000, scoped, tag = 'output window, operand 0']
    %8 = vsyncpa [#allocation7], 0
    %9 = vsyncpa [#allocation10], 0
    %s10 = scalar_lea.sflag [#allocation10], 1
    %11 = vsyncpa %s10, 0
    %12 = vsyncpa [#allocation8], 0
    %s13 = scalar_lea.sflag [#allocation8], 1
    %14 = vsyncpa %s13, 0
    loop: start=0, step=1, limit=6
    $region2: #{tpu_custom_call.1} parent=1 // loop_pre_header
      _
    $region3: #{tpu_custom_call.1} parent=1 // loop_header
      %s16 = sphi 0, %s20
      %p17 = scmp.ge.s32.totalorder %s16, 6
      %s23 = sphi 0, %s35
      %s24 = sphi 0, %s31
      %s25 = sphi 0, %s23
      %s26 = sphi 0, %s24
      %s27 = sphi 0, %s25
      %s28 = sphi 0, %s26
      %s36 = sphi 0, %s36
      %s38 = sphi 0, %s36
      %s39 = sphi 0, %s38
      %s53 = sphi 0, %s39
      %s63 = sphi 0, %s65
      %s66 = sphi 0, %s63
      %s67 = sphi 0, %s66
      %s83 = sphi 0, %s67
      %s87 = sphi 0, %s87
      %s89 = sphi 0, %s87
      %s90 = sphi 0, %s89
      %s104 = sphi 0, %s90
      %s110 = sphi 0, %s112
      %s113 = sphi 0, %s110
      %s114 = sphi 0, %s113
      %s130 = sphi 0, %s114
    $region4: #{tpu_custom_call.1} parent=1 // loop_header_branch
      %19 = sbr.rel (%p17) target = $region8
    $region5: #{tpu_custom_call.1} parent=1 // loop_body
      %s21 = ssub.s32 %s16, 1
      %s22 = ssub.s32 %s16, 2
      %s29 = sadd.s32 1, %s24
      %p30 = scmp.ge.s32.totalorder %s29, 2
      %s31 = scalar_select %p30, 0, %s29
      %s32 = sadd.s32 1, %s23
      %s33 = scalar_select %p30, %s32, %s23
      %p34 = scmp.ge.s32.totalorder %s33, 2
      %s35 = scalar_select %p34, 0, %s33
      %s37 = sadd.s32 %s36, 1
      %p40 = scmp.eq.s32.totalorder %s16, 3
      %p41 = scmp.ne.s32.totalorder %s36, %s38
      %p42 = scmp.eq.s32.totalorder %s16, 0
      %p43 = por %p41, %p42
      %p44 = scmp.ne.s32.totalorder %s36, %s38
      %p45 = scmp.eq.s32.totalorder %s21, 3
      %p46 = por %p44, %p45
      %p47 = scmp.ne.s32.totalorder %s38, %s39
      %p48 = scmp.eq.s32.totalorder %s21, 0
      %p49 = por %p47, %p48
      %p50 = scmp.ne.s32.totalorder %s38, %s39
      %p51 = scmp.eq.s32.totalorder %s22, 3
      %p52 = por %p50, %p51
      %p54 = scmp.ne.s32.totalorder %s39, %s53
      %p55 = scmp.eq.s32.totalorder %s22, 0
      %p56 = por %p54, %p55
      %s57 = smul.u32 %s23, 2
      %s58 = sadd.s32 %s57, %s24
      %s59 = smul.u32 %s35, 2
      %s60 = sadd.s32 %s59, %s31
      %s61 = ssub.s32 %s58, %s60
      %p62 = scmp.eq.s32.totalorder %s61, 0
      %s64 = sadd.s32 %s63, 1
      %s65 = scalar_select %p62, %s63, %s64
      %p68 = pneg %p62
      %p69 = scmp.eq.s32.totalorder %s16, 3
      %p70 = por %p68, %p69
      %p71 = scmp.ne.s32.totalorder %s63, %s66
      %p72 = scmp.eq.s32.totalorder %s16, 0
      %p73 = por %p71, %p72
      %p74 = scmp.ne.s32.totalorder %s63, %s66
      %p75 = scmp.eq.s32.totalorder %s21, 3
      %p76 = por %p74, %p75
      %p77 = scmp.ne.s32.totalorder %s66, %s67
      %p78 = scmp.eq.s32.totalorder %s21, 0
      %p79 = por %p77, %p78
      %p80 = scmp.ne.s32.totalorder %s66, %s67
      %p81 = scmp.eq.s32.totalorder %s22, 3
      %p82 = por %p80, %p81
      %p84 = scmp.ne.s32.totalorder %s67, %s83
      %p85 = scmp.eq.s32.totalorder %s22, 0
      %p86 = por %p84, %p85
      %s88 = sadd.s32 %s87, 1
      %p91 = scmp.eq.s32.totalorder %s16, 3
      %p92 = scmp.ne.s32.totalorder %s87, %s89
      %p93 = scmp.eq.s32.totalorder %s16, 0
      %p94 = por %p92, %p93
      %p95 = scmp.ne.s32.totalorder %s87, %s89
      %p96 = scmp.eq.s32.totalorder %s21, 3
      %p97 = por %p95, %p96
      %p98 = scmp.ne.s32.totalorder %s89, %s90
      %p99 = scmp.eq.s32.totalorder %s21, 0
      %p100 = por %p98, %p99
      %p101 = scmp.ne.s32.totalorder %s89, %s90
      %p102 = scmp.eq.s32.totalorder %s22, 3
      %p103 = por %p101, %p102
      %p105 = scmp.ne.s32.totalorder %s90, %s104
      %p106 = scmp.eq.s32.totalorder %s22, 0
      %p107 = por %p105, %p106
      %s108 = ssub.s32 %s23, %s35
      %p109 = scmp.eq.s32.totalorder %s108, 0
      %s111 = sadd.s32 %s110, 1
      %s112 = scalar_select %p109, %s110, %s111
      %p115 = pneg %p109
      %p116 = scmp.eq.s32.totalorder %s16, 3
      %p117 = por %p115, %p116
      %p118 = scmp.ne.s32.totalorder %s110, %s113
      %p119 = scmp.eq.s32.totalorder %s16, 0
      %p120 = por %p118, %p119
      %p121 = scmp.ne.s32.totalorder %s110, %s113
      %p122 = scmp.eq.s32.totalorder %s21, 3
      %p123 = por %p121, %p122
      %p124 = scmp.ne.s32.totalorder %s113, %s114
      %p125 = scmp.eq.s32.totalorder %s21, 0
      %p126 = por %p124, %p125
      %p127 = scmp.ne.s32.totalorder %s113, %s114
      %p128 = scmp.eq.s32.totalorder %s22, 3
      %p129 = por %p127, %p128
      %p131 = scmp.ne.s32.totalorder %s114, %s130
      %p132 = scmp.eq.s32.totalorder %s22, 0
      %p133 = por %p131, %p132
      %p134 = scmp.le.s32.totalorder 1, %s16
      %p135 = scmp.lt.s32.totalorder %s16, 5
      %p136 = pnand %p134, %p135
      %p137 = pneg %p136
      // Predicated region
      $region9: #{tpu_custom_call.1} parent=5 // pred_check
        _
      $region10: #{tpu_custom_call.1} parent=5 // pred_check_branch
        %139 = sbr.rel (%p136) target = $region12
      $region11: #{tpu_custom_call.1} parent=5 // pred_region
        %s140 = ssub.s32 %s16, 1
        // Predicated region
        $region13: #{tpu_custom_call.1} parent=11 // pred_check
          %p141 = pneg %p49
        $region14: #{tpu_custom_call.1} parent=11 // pred_check_branch
          %143 = sbr.rel (%p141) target = $region16
        $region15: #{tpu_custom_call.1} parent=11 // pred_region
          %s145 = ssub.s32 512, 512
          %146 = vsyncadd [#allocation7], %s145
          %s148 = sshll.u32 [#allocation6], 4
          %s149 = int_to_ptr.vmem [resolvable:$true] %s148
          %151 = dma.hbm_to_vmem [thread:$0]  %s0, 512, %s149, [#allocation7]
        $region16: #{tpu_custom_call.1} parent=11 // pred_fallthru
          _
        // Predicated region
        $region17: #{tpu_custom_call.1} parent=11 // pred_check
          %p152 = pneg %p100
        $region18: #{tpu_custom_call.1} parent=11 // pred_check_branch
          %154 = sbr.rel (%p152) target = $region20
        $region19: #{tpu_custom_call.1} parent=11 // pred_region
          _
        $region20: #{tpu_custom_call.1} parent=11 // pred_fallthru
          _
      $region12: #{tpu_custom_call.1} parent=5 // pred_fallthru
        _
      %p155 = scmp.lt.s32.totalorder %s16, 4
      // Predicated region
      $region21: #{tpu_custom_call.1} parent=5 // pred_check
        %p156 = pneg %p155
      $region22: #{tpu_custom_call.1} parent=5 // pred_check_branch
        %158 = sbr.rel (%p156) target = $region24
      $region23: #{tpu_custom_call.1} parent=5 // pred_region
        // Predicated region
        $region25: #{tpu_custom_call.1} parent=23 // pred_check
          %p159 = pneg %p73
        $region26: #{tpu_custom_call.1} parent=23 // pred_check_branch
          %161 = sbr.rel (%p159) target = $region28
        $region27: #{tpu_custom_call.1} parent=23 // pred_region
          %s162 = sand.u32 %s63, 1
          %s163 = scalar_lea.sflag [#allocation10], %s162
          %s164 = sand.u32 %s63, 1
          %s165 = smul.addr %s164, 256
          %s166 = scalar_lea.vmem [#allocation9], %s165
          %s167 = smul.u32 %s23, 2
          %s168 = sadd.s32 %s167, %s24
          %s170 = ssub.s32 4096, 4096
          %171 = vsyncadd %s163, %s170
          %s172 = smul.addr %s168, 64
          %s173 = scalar_lea.hbm %s1, %s172
          %s174 = sshll.u32 %s166, 4
          %s175 = int_to_ptr.vmem [resolvable:$true] %s174
          %180 = dma.hbm_to_vmem [thread:$0]  %s173, 4096, %s175, %s163, 256, 64, 4
        $region28: #{tpu_custom_call.1} parent=23 // pred_fallthru
          _
      $region24: #{tpu_custom_call.1} parent=5 // pred_fallthru
        _
      %p181 = scmp.le.s32.totalorder 1, %s16
      %p182 = scmp.lt.s32.totalorder %s16, 5
      %p183 = pnand %p181, %p182
      %p184 = pneg %p183
      // Predicated region
      $region29: #{tpu_custom_call.1} parent=5 // pred_check
        _
      $region30: #{tpu_custom_call.1} parent=5 // pred_check_branch
        %186 = sbr.rel (%p183) target = $region32
      $region31: #{tpu_custom_call.1} parent=5 // pred_region
        %s187 = ssub.s32 %s16, 1
        // Predicated region
        $region33: #{tpu_custom_call.1} parent=31 // pred_check
          %p188 = pneg %p49
        $region34: #{tpu_custom_call.1} parent=31 // pred_check_branch
          %190 = sbr.rel (%p188) target = $region36
        $region35: #{tpu_custom_call.1} parent=31 // pred_region
          %191 = dma.done [#allocation7], 512
        $region36: #{tpu_custom_call.1} parent=31 // pred_fallthru
          _
        %s192 = sand.u32 %s66, 1
        %s193 = scalar_lea.sflag [#allocation10], %s192
        %s194 = sand.u32 %s66, 1
        %s195 = smul.addr %s194, 256
        %s196 = scalar_lea.vmem [#allocation9], %s195
        // Predicated region
        $region37: #{tpu_custom_call.1} parent=31 // pred_check
          %p197 = pneg %p79
        $region38: #{tpu_custom_call.1} parent=31 // pred_check_branch
          %199 = sbr.rel (%p197) target = $region40
        $region39: #{tpu_custom_call.1} parent=31 // pred_region
          %200 = dma.done %s193, 4096
        $region40: #{tpu_custom_call.1} parent=31 // pred_fallthru
          _
        %p201 = pneg %p49
        %p202 = pneg %p46
        %s203 = sand.u32 %s66, 1
        %s204 = scalar_lea.sflag [#allocation10], %s203
        %s205 = sand.u32 %s66, 1
        %s206 = smul.addr %s205, 256
        %s207 = scalar_lea.vmem [#allocation9], %s206
        %p208 = pneg %p79
        %p209 = pneg %p76
        %p210 = pneg %p100
        %p211 = pneg %p97
        %p212 = pneg %p126
        %p213 = pneg %p123
        %s214 = sand.u32 %s113, 1
        %s215 = scalar_lea.sflag [#allocation8], %s214
        %s216 = sand.u32 %s113, 1
        %s217 = smul.addr %s216, 8
        %s218 = scalar_lea.vmem [#allocation11], %s217
        %s219 = smul.u32 %s25, 2
        %s220 = sadd.s32 %s219, %s26
        %p222 = scmp.eq.s32.totalorder %s26, 0
        // Predicated region
        $region41: #{tpu_custom_call.1} parent=31 // pred_check
          %p223 = pneg %p222
        $region42: #{tpu_custom_call.1} parent=31 // pred_check_branch
          %225 = sbr.rel (%p223) target = $region44
        $region43: #{tpu_custom_call.1} parent=31 // pred_region
          %vm226 = vcmask 7168
          %227 = vst.msk [vmem:[#allocation2] sm:$0xff] %vm226, -inf
          %228 = vst.msk [vmem:[#allocation3] sm:$0xff] %vm226, 0.0
          %229 = vst.msk [vmem:[#allocation4] sm:$0xff] %vm226, 0.0
          %v230 = vld [vmem:[#allocation6] sm:$0xff]
          %v231 = vld [vmem:[#allocation6 + $0x8] sm:$0xff]
          %v232 = vld [vmem:[#allocation6 + $0x10] sm:$0xff]
          %v233 = vld [vmem:[#allocation6 + $0x18] sm:$0xff]
          %v234 = vmul.f32 %v230, %v230
          %v235 = vmul.f32 %v231, %v231
          %v236 = vmul.f32 %v232, %v232
          %v237 = vmul.f32 %v233, %v233
          %v238 = vadd.f32 %v234, %v235
          %v239 = vadd.f32 %v238, %v236
          %v240 = vadd.f32 %v239, %v237
          %241 = vadd.xlane.f32.xlu0 %v240
          %v242 = vpop.xlane.xlu0 %241
          %v243 = vmax.f32 %v242, 1e-24
          %v244 = vrsqrt.pop %v243
          %v245 = vmul.f32 %v230, %v244
          %v246 = vmul.f32 %v231, %v244
          %v247 = vmul.f32 %v232, %v244
          %v248 = vmul.f32 %v233, %v244
          %v249 = vpack.c.bf16 %v245, %v245
          %v250 = vpack.c.bf16 %v246, %v246
          %v251 = vpack.c.bf16 %v247, %v247
          %v252 = vpack.c.bf16 %v248, %v248
          %v257 = vunpack.c.l.b16 %v249
          %v258 = vunpack.c.l.b16 %v250
          %v259 = vunpack.c.l.b16 %v251
          %v260 = vunpack.c.l.b16 %v252
          %v261 = vpack.c.b16 %v258, %v257
          %v262 = vpack.c.b16 %v260, %v259
          %265 = vst [vmem:[#allocation5] sm:$0xff] %v261
          %266 = vst [vmem:[#allocation5 + $0x8] sm:$0xff] %v262
        $region44: #{tpu_custom_call.1} parent=31 // pred_fallthru
          _
        %v267 = vld [vmem:[#allocation5] sm:$0xff]
        %v268 = vld [vmem:[#allocation5 + $0x8] sm:$0xff]
        %v269 = vld [vmem:[%s196] sm:$0xf]
        %v270 = vld [vmem:[%s196 + $0x4] sm:$0xf]
        %v271 = vld [vmem:[%s196 + $0x8] sm:$0xf]
        %v272 = vld [vmem:[%s196 + $0xc] sm:$0xf]
        %v273 = vld [vmem:[%s196 + $0x10] sm:$0xf]
        %v274 = vld [vmem:[%s196 + $0x14] sm:$0xf]
        %v275 = vld [vmem:[%s196 + $0x18] sm:$0xf]
        %v276 = vld [vmem:[%s196 + $0x1c] sm:$0xf]
        %v277 = vld [vmem:[%s196 + $0x20] sm:$0xf]
        %v278 = vld [vmem:[%s196 + $0x24] sm:$0xf]
        %v279 = vld [vmem:[%s196 + $0x28] sm:$0xf]
        %v280 = vld [vmem:[%s196 + $0x2c] sm:$0xf]
        %v281 = vld [vmem:[%s196 + $0x30] sm:$0xf]
        %v282 = vld [vmem:[%s196 + $0x34] sm:$0xf]
        %v283 = vld [vmem:[%s196 + $0x38] sm:$0xf]
        %v284 = vld [vmem:[%s196 + $0x3c] sm:$0xf]
        %v285 = vld [vmem:[%s196 + $0x40] sm:$0xf]
        %v286 = vld [vmem:[%s196 + $0x44] sm:$0xf]
        %v287 = vld [vmem:[%s196 + $0x48] sm:$0xf]
        %v288 = vld [vmem:[%s196 + $0x4c] sm:$0xf]
        %v289 = vld [vmem:[%s196 + $0x50] sm:$0xf]
        %v290 = vld [vmem:[%s196 + $0x54] sm:$0xf]
        %v291 = vld [vmem:[%s196 + $0x58] sm:$0xf]
        %v292 = vld [vmem:[%s196 + $0x5c] sm:$0xf]
        %v293 = vld [vmem:[%s196 + $0x60] sm:$0xf]
        %v294 = vld [vmem:[%s196 + $0x64] sm:$0xf]
        %v295 = vld [vmem:[%s196 + $0x68] sm:$0xf]
        %v296 = vld [vmem:[%s196 + $0x6c] sm:$0xf]
        %v297 = vld [vmem:[%s196 + $0x70] sm:$0xf]
        %v298 = vld [vmem:[%s196 + $0x74] sm:$0xf]
        %v299 = vld [vmem:[%s196 + $0x78] sm:$0xf]
        %v300 = vld [vmem:[%s196 + $0x7c] sm:$0xf]
        %v301 = vld [vmem:[%s196 + $0x80] sm:$0xf]
        %v302 = vld [vmem:[%s196 + $0x84] sm:$0xf]
        %v303 = vld [vmem:[%s196 + $0x88] sm:$0xf]
        %v304 = vld [vmem:[%s196 + $0x8c] sm:$0xf]
        %v305 = vld [vmem:[%s196 + $0x90] sm:$0xf]
        %v306 = vld [vmem:[%s196 + $0x94] sm:$0xf]
        %v307 = vld [vmem:[%s196 + $0x98] sm:$0xf]
        %v308 = vld [vmem:[%s196 + $0x9c] sm:$0xf]
        %v309 = vld [vmem:[%s196 + $0xa0] sm:$0xf]
        %v310 = vld [vmem:[%s196 + $0xa4] sm:$0xf]
        %v311 = vld [vmem:[%s196 + $0xa8] sm:$0xf]
        %v312 = vld [vmem:[%s196 + $0xac] sm:$0xf]
        %v313 = vld [vmem:[%s196 + $0xb0] sm:$0xf]
        %v314 = vld [vmem:[%s196 + $0xb4] sm:$0xf]
        %v315 = vld [vmem:[%s196 + $0xb8] sm:$0xf]
        %v316 = vld [vmem:[%s196 + $0xbc] sm:$0xf]
        %v317 = vld [vmem:[%s196 + $0xc0] sm:$0xf]
        %v318 = vld [vmem:[%s196 + $0xc4] sm:$0xf]
        %v319 = vld [vmem:[%s196 + $0xc8] sm:$0xf]
        %v320 = vld [vmem:[%s196 + $0xcc] sm:$0xf]
        %v321 = vld [vmem:[%s196 + $0xd0] sm:$0xf]
        %v322 = vld [vmem:[%s196 + $0xd4] sm:$0xf]
        %v323 = vld [vmem:[%s196 + $0xd8] sm:$0xf]
        %v324 = vld [vmem:[%s196 + $0xdc] sm:$0xf]
        %v325 = vld [vmem:[%s196 + $0xe0] sm:$0xf]
        %v326 = vld [vmem:[%s196 + $0xe4] sm:$0xf]
        %v327 = vld [vmem:[%s196 + $0xe8] sm:$0xf]
        %v328 = vld [vmem:[%s196 + $0xec] sm:$0xf]
        %v329 = vld [vmem:[%s196 + $0xf0] sm:$0xf]
        %v330 = vld [vmem:[%s196 + $0xf4] sm:$0xf]
        %v331 = vld [vmem:[%s196 + $0xf8] sm:$0xf]
        %v332 = vld [vmem:[%s196 + $0xfc] sm:$0xf]
        %v335 = vunpack.c.l.b16 %v267
        %v336 = vunpack.c.h.b16 %v267
        %v337 = vunpack.c.l.b16 %v268
        %v338 = vunpack.c.h.b16 %v268
        %v339 = vpack.c.b16 %v335, %v335
        %v340 = vpack.c.b16 %v336, %v336
        %v341 = vpack.c.b16 %v337, %v337
        %v342 = vpack.c.b16 %v338, %v338
        %v411 = vunpack.c.l.b16 %v269
        %v412 = vunpack.c.l.b16 %v270
        %v413 = vunpack.c.l.b16 %v271
        %v414 = vunpack.c.l.b16 %v272
        %v415 = vunpack.c.l.b16 %v273
        %v416 = vunpack.c.l.b16 %v274
        %v417 = vunpack.c.l.b16 %v275
        %v418 = vunpack.c.l.b16 %v276
        %v419 = vunpack.c.l.b16 %v277
        %v420 = vunpack.c.l.b16 %v278
        %v421 = vunpack.c.l.b16 %v279
        %v422 = vunpack.c.l.b16 %v280
        %v423 = vunpack.c.l.b16 %v281
        %v424 = vunpack.c.l.b16 %v282
        %v425 = vunpack.c.l.b16 %v283
        %v426 = vunpack.c.l.b16 %v284
        %v427 = vunpack.c.l.b16 %v285
        %v428 = vunpack.c.l.b16 %v286
        %v429 = vunpack.c.l.b16 %v287
        %v430 = vunpack.c.l.b16 %v288
        %v431 = vunpack.c.l.b16 %v289
        %v432 = vunpack.c.l.b16 %v290
        %v433 = vunpack.c.l.b16 %v291
        %v434 = vunpack.c.l.b16 %v292
        %v435 = vunpack.c.l.b16 %v293
        %v436 = vunpack.c.l.b16 %v294
        %v437 = vunpack.c.l.b16 %v295
        %v438 = vunpack.c.l.b16 %v296
        %v439 = vunpack.c.l.b16 %v297
        %v440 = vunpack.c.l.b16 %v298
        %v441 = vunpack.c.l.b16 %v299
        %v442 = vunpack.c.l.b16 %v300
        %v443 = vunpack.c.l.b16 %v301
        %v444 = vunpack.c.l.b16 %v302
        %v445 = vunpack.c.l.b16 %v303
        %v446 = vunpack.c.l.b16 %v304
        %v447 = vunpack.c.l.b16 %v305
        %v448 = vunpack.c.l.b16 %v306
        %v449 = vunpack.c.l.b16 %v307
        %v450 = vunpack.c.l.b16 %v308
        %v451 = vunpack.c.l.b16 %v309
        %v452 = vunpack.c.l.b16 %v310
        %v453 = vunpack.c.l.b16 %v311
        %v454 = vunpack.c.l.b16 %v312
        %v455 = vunpack.c.l.b16 %v313
        %v456 = vunpack.c.l.b16 %v314
        %v457 = vunpack.c.l.b16 %v315
        %v458 = vunpack.c.l.b16 %v316
        %v459 = vunpack.c.l.b16 %v317
        %v460 = vunpack.c.l.b16 %v318
        %v461 = vunpack.c.l.b16 %v319
        %v462 = vunpack.c.l.b16 %v320
        %v463 = vunpack.c.l.b16 %v321
        %v464 = vunpack.c.l.b16 %v322
        %v465 = vunpack.c.l.b16 %v323
        %v466 = vunpack.c.l.b16 %v324
        %v467 = vunpack.c.l.b16 %v325
        %v468 = vunpack.c.l.b16 %v326
        %v469 = vunpack.c.l.b16 %v327
        %v470 = vunpack.c.l.b16 %v328
        %v471 = vunpack.c.l.b16 %v329
        %v472 = vunpack.c.l.b16 %v330
        %v473 = vunpack.c.l.b16 %v331
        %v474 = vunpack.c.l.b16 %v332
        %v475 = vpack.c.b16 %v412, %v411
        %v476 = vpack.c.b16 %v414, %v413
        %v477 = vpack.c.b16 %v416, %v415
        %v478 = vpack.c.b16 %v418, %v417
        %v479 = vpack.c.b16 %v420, %v419
        %v480 = vpack.c.b16 %v422, %v421
        %v481 = vpack.c.b16 %v424, %v423
        %v482 = vpack.c.b16 %v426, %v425
        %v483 = vpack.c.b16 %v428, %v427
        %v484 = vpack.c.b16 %v430, %v429
        %v485 = vpack.c.b16 %v432, %v431
        %v486 = vpack.c.b16 %v434, %v433
        %v487 = vpack.c.b16 %v436, %v435
        %v488 = vpack.c.b16 %v438, %v437
        %v489 = vpack.c.b16 %v440, %v439
        %v490 = vpack.c.b16 %v442, %v441
        %v491 = vpack.c.b16 %v444, %v443
        %v492 = vpack.c.b16 %v446, %v445
        %v493 = vpack.c.b16 %v448, %v447
        %v494 = vpack.c.b16 %v450, %v449
        %v495 = vpack.c.b16 %v452, %v451
        %v496 = vpack.c.b16 %v454, %v453
        %v497 = vpack.c.b16 %v456, %v455
        %v498 = vpack.c.b16 %v458, %v457
        %v499 = vpack.c.b16 %v460, %v459
        %v500 = vpack.c.b16 %v462, %v461
        %v501 = vpack.c.b16 %v464, %v463
        %v502 = vpack.c.b16 %v466, %v465
        %v503 = vpack.c.b16 %v468, %v467
        %v504 = vpack.c.b16 %v470, %v469
        %v505 = vpack.c.b16 %v472, %v471
        %v506 = vpack.c.b16 %v474, %v473
        %539 = vmatprep.subr.bf16.mxu0 0
        %540 = vmatpush1.bf16.msra.mxu0 %v475
        %541 = vmatprep.subr.bf16.mxu0 0
        %542 = vmatpush1.bf16.msra.mxu0 %v476
        %543 = vmatprep.subr.bf16.mxu0 0
        %544 = vmatpush1.bf16.msra.mxu0 %v477
        %545 = vmatprep.subr.bf16.mxu0 0
        %546 = vmatpush1.bf16.msra.mxu0 %v478
        %547 = vmatprep.subr.bf16.mxu0 0
        %548 = vmatpush1.bf16.msra.mxu0 %v479
        %549 = vmatprep.subr.bf16.mxu0 0
        %550 = vmatpush1.bf16.msra.mxu0 %v480
        %551 = vmatprep.subr.bf16.mxu0 0
        %552 = vmatpush1.bf16.msra.mxu0 %v481
        %553 = vmatprep.subr.bf16.mxu0 0
        %554 = vmatpush1.bf16.msra.mxu0 %v482
        %555 = vmatprep.subr.bf16.mxu0 0
        %556 = vmatpush1.bf16.msra.mxu0 %v483
        %557 = vmatprep.subr.bf16.mxu0 0
        %558 = vmatpush1.bf16.msra.mxu0 %v484
        %559 = vmatprep.subr.bf16.mxu0 0
        %560 = vmatpush1.bf16.msra.mxu0 %v485
        %561 = vmatprep.subr.bf16.mxu0 0
        %562 = vmatpush1.bf16.msra.mxu0 %v486
        %563 = vmatprep.subr.bf16.mxu0 0
        %564 = vmatpush1.bf16.msra.mxu0 %v487
        %565 = vmatprep.subr.bf16.mxu0 0
        %566 = vmatpush1.bf16.msra.mxu0 %v488
        %567 = vmatprep.subr.bf16.mxu0 0
        %568 = vmatpush1.bf16.msra.mxu0 %v489
        %569 = vmatprep.subr.bf16.mxu0 0
        %570 = vmatpush1.bf16.msra.mxu0 %v490
        %571 = vmatprep.mubr.bf16.mxu0 %v340
        %572 = vmatmul.mubr.bf16.gmra.mrb[0].mxu0 %v339
        %v573 = vpop.f32.mrb[0].mxu0
        %v574 = vadd.f32 0.0, %v573
        %v575 = vpop.f32.mrb[0].mxu0
        %v576 = vpop.f32.mrb[0].mxu0
        %v577 = vpop.f32.mrb[0].mxu0
        %578 = vdwg.mxu0
        %579 = vmatprep.subr.bf16.mxu0 0
        %580 = vmatpush1.bf16.msra.mxu0 %v491
        %581 = vmatprep.subr.bf16.mxu0 0
        %582 = vmatpush1.bf16.msra.mxu0 %v492
        %583 = vmatprep.subr.bf16.mxu0 0
        %584 = vmatpush1.bf16.msra.mxu0 %v493
        %585 = vmatprep.subr.bf16.mxu0 0
        %586 = vmatpush1.bf16.msra.mxu0 %v494
        %587 = vmatprep.subr.bf16.mxu0 0
        %588 = vmatpush1.bf16.msra.mxu0 %v495
        %589 = vmatprep.subr.bf16.mxu0 0
        %590 = vmatpush1.bf16.msra.mxu0 %v496
        %591 = vmatprep.subr.bf16.mxu0 0
        %592 = vmatpush1.bf16.msra.mxu0 %v497
        %593 = vmatprep.subr.bf16.mxu0 0
        %594 = vmatpush1.bf16.msra.mxu0 %v498
        %595 = vmatprep.subr.bf16.mxu0 0
        %596 = vmatpush1.bf16.msra.mxu0 %v499
        %597 = vmatprep.subr.bf16.mxu0 0
        %598 = vmatpush1.bf16.msra.mxu0 %v500
        %599 = vmatprep.subr.bf16.mxu0 0
        %600 = vmatpush1.bf16.msra.mxu0 %v501
        %601 = vmatprep.subr.bf16.mxu0 0
        %602 = vmatpush1.bf16.msra.mxu0 %v502
        %603 = vmatprep.subr.bf16.mxu0 0
        %604 = vmatpush1.bf16.msra.mxu0 %v503
        %605 = vmatprep.subr.bf16.mxu0 0
        %606 = vmatpush1.bf16.msra.mxu0 %v504
        %607 = vmatprep.subr.bf16.mxu0 0
        %608 = vmatpush1.bf16.msra.mxu0 %v505
        %609 = vmatprep.subr.bf16.mxu0 0
        %610 = vmatpush1.bf16.msra.mxu0 %v506
        %611 = vmatprep.mubr.bf16.mxu0 %v342
        %612 = vmatmul.mubr.bf16.gmra.mrb[0].mxu0 %v341
        %v613 = vpop.f32.mrb[0].mxu0
        %v614 = vadd.f32 %v574, %v613
        %v615 = vpop.f32.mrb[0].mxu0
        %v616 = vpop.f32.mrb[0].mxu0
        %v617 = vpop.f32.mrb[0].mxu0
        %618 = vdwg.mxu0
        %v619 = vld [vmem:[%s2] sm:$0xff]
        %s620 = smul.u32 %s25, 2
        %s621 = sadd.s32 %s620, %s26
        %s622 = smul.u32 %s621, 128
        %v623 = vlaneseq
        %v624 = vand.u32 %v623, 127
        %v625 = vstv %s622
        %v626 = vadd.s32 %v625, %v624
        %627 = vset.pattern.permute.xlu0 0
        %628 = vperm.xlu0 %627, %v619
        %v629 = vpop.permute.xlu0 %628
        %vm630 = vcmp.eq.s32.totalorder %v626, %v629
        %v631 = vld [vmem:[#allocation4] sm:$0xff]
        %v632 = vsel %vm630, %v614, 0.0
        %633 = vadd.xlane.f32.xlu0 %v632
        %v634 = vpop.xlane.xlu0 %633
        %v635 = vadd.f32 %v631, %v634
        %vm636 = vcmask 7168
        %637 = vst.msk [vmem:[#allocation4] sm:$0xff] %vm636, %v635
        %vm638 = vmxor %vm630, 1
        %vm639 = vcmp.lt.s32.totalorder %v626, 500
        %vm640 = vmand %vm638, %vm639
        %v641 = vmul.f32 %v614, 30.0
        %v642 = vsel %vm640, %v641, -inf
        %v643 = vld [vmem:[#allocation2] sm:$0xff]
        %644 = vmax.xlane.f32.xlu0 %v642
        %v645 = vpop.xlane.xlu0 %644
        %v646 = vmax.f32 %v643, %v645
        %vm647 = vcmp.gt.f32.partialorder %v646, -inf
        %v648 = vsub.f32 %v643, %v646
        %v649 = vmul.f32 %v648, 1.442695
        %v650 = vpow.pop %v649
        %v651 = vsel %vm647, %v650, 0.0
        %653 = vset.pattern.permute.xlu0 0
        %654 = vperm.xlu0 %653, %v646
        %v655 = vpop.permute.xlu0 %654
        %v657 = vsub.f32 %v642, %v655
        %v658 = vmul.f32 %v657, 1.442695
        %v659 = vpow.pop %v658
        %v660 = vsel %vm640, %v659, 0.0
        %661 = vadd.xlane.f32.xlu0 %v660
        %v662 = vpop.xlane.xlu0 %661
        %v663 = vld [vmem:[#allocation3] sm:$0xff]
        %v664 = vmul.f32 %v663, %v651
        %v665 = vadd.f32 %v664, %v662
        %666 = vst.msk [vmem:[#allocation3] sm:$0xff] %vm636, %v665
        %667 = vst.msk [vmem:[#allocation2] sm:$0xff] %vm636, %v646
        %p668 = scmp.eq.s32.totalorder %s26, 1
        // Predicated region
        $region45: #{tpu_custom_call.1} parent=31 // pred_check
          %p669 = pneg %p668
        $region46: #{tpu_custom_call.1} parent=31 // pred_check_branch
          %671 = sbr.rel (%p669) target = $region48
        $region47: #{tpu_custom_call.1} parent=31 // pred_region
          %v672 = vld [vmem:[#allocation2] sm:$0xff]
          %v673 = vld [vmem:[#allocation3] sm:$0xff]
          %v674 = vld [vmem:[#allocation4] sm:$0xff]
          %vm675 = vcmp.eq.s32.totalorder %v624, 0
          %vm676 = vcmp.eq.s32.totalorder %v624, 1
          %vm677 = vcmp.eq.s32.totalorder %v624, 2
          %679 = vset.pattern.permute.xlu0 0
          %680 = vperm.xlu0 %679, %v674
          %v681 = vpop.permute.xlu0 %680
          %v683 = vsel %vm677, %v681, 0.0
          %685 = vset.pattern.permute.xlu0 0
          %686 = vperm.xlu0 %685, %v673
          %v687 = vpop.permute.xlu0 %686
          %v689 = vsel %vm676, %v687, %v683
          %691 = vset.pattern.permute.xlu0 0
          %692 = vperm.xlu0 %691, %v672
          %v693 = vpop.permute.xlu0 %692
          %v695 = vsel %vm675, %v693, %v689
          %696 = vst [vmem:[%s218] sm:$0xff] %v695
        $region48: #{tpu_custom_call.1} parent=31 // pred_fallthru
          _
        %s697 = sand.u32 %s113, 1
        %s698 = scalar_lea.sflag [#allocation8], %s697
        %s699 = sand.u32 %s113, 1
        %s700 = smul.addr %s699, 8
        %s701 = scalar_lea.vmem [#allocation11], %s700
        // Predicated region
        $region49: #{tpu_custom_call.1} parent=31 // pred_check
          %p702 = pneg %p123
        $region50: #{tpu_custom_call.1} parent=31 // pred_check_branch
          %704 = sbr.rel (%p702) target = $region52
        $region51: #{tpu_custom_call.1} parent=31 // pred_region
          %s706 = ssub.s32 128, 128
          %707 = vsyncadd %s698, %s706
          %s708 = smul.addr %s25, 128
          %s709 = scalar_lea.hbm %s3, %s708
          %s711 = sshll.u32 %s701, 4
          %s712 = int_to_ptr.vmem [resolvable:$true] %s711
          %714 = dma.vmem_to_hbm [thread:$0]  %s712, 128, %s709, %s698
        $region52: #{tpu_custom_call.1} parent=31 // pred_fallthru
          _
      $region32: #{tpu_custom_call.1} parent=5 // pred_fallthru
        _
      %p715 = scmp.le.s32.totalorder 2, %s16
      // Predicated region
      $region53: #{tpu_custom_call.1} parent=5 // pred_check
        %p716 = pneg %p715
      $region54: #{tpu_custom_call.1} parent=5 // pred_check_branch
        %718 = sbr.rel (%p716) target = $region56
      $region55: #{tpu_custom_call.1} parent=5 // pred_region
        %s719 = ssub.s32 %s16, 2
        // Predicated region
        $region57: #{tpu_custom_call.1} parent=55 // pred_check
          %p720 = pneg %p129
        $region58: #{tpu_custom_call.1} parent=55 // pred_check_branch
          %722 = sbr.rel (%p720) target = $region60
        $region59: #{tpu_custom_call.1} parent=55 // pred_region
          %s723 = sand.u32 %s114, 1
          %s724 = scalar_lea.sflag [#allocation8], %s723
          %s725 = sand.u32 %s114, 1
          %s726 = smul.addr %s725, 8
          %s727 = scalar_lea.vmem [#allocation11], %s726
          %728 = dma.done %s724, 128
        $region60: #{tpu_custom_call.1} parent=55 // pred_fallthru
          _
      $region56: #{tpu_custom_call.1} parent=5 // pred_fallthru
        _
    $region6: #{tpu_custom_call.1} parent=1 // loop_footer
      %s20 = sadd.s32 1, %s16
    $region7: #{tpu_custom_call.1} parent=1 // loop_footer_branch
      %15 = sbr.rel target = $region3
    $region8: #{tpu_custom_call.1} parent=1 // loop_exit
      _
    %729 = vsyncpa [#allocation7], 1
    %s730 = scalar_lea.sflag [#allocation7], 1
    %731 = vsyncpa %s730, 1
    %732 = vsyncpa [#allocation10], 1
    %s733 = scalar_lea.sflag [#allocation10], 1
    %734 = vsyncpa %s733, 1
    %735 = vsyncpa [#allocation8], 1
    %s736 = scalar_lea.sflag [#allocation8], 1
    %737 = vsyncpa %s736, 1

</llo_original>
